<compile_context>
chip_gen: v7x
topology: tpu7x:2x2x1
jax: 0.10.0
libtpu: 0.0.40
codegen_flags: <defaults>
</compile_context>

<pallas_src>
import functools

import jax
import jax.numpy as jnp
from jax import lax
from jax.experimental import pallas as pl
from jax.experimental.pallas import tpu as pltpu


# --------------------------------------------------------------------------
# Kernels
# --------------------------------------------------------------------------
def _affine_kernel_kloop(x_ref, w_ref, b_ref, o_ref, acc_ref):
    """General case: K is tiled over grid axis 2 (reduction, 'arbitrary')."""
    # x_ref: (tm, tk)  w_ref: (tn, tk)  b_ref: (1, tn)
    # o_ref: (tm, tn)  acc_ref: (tm, tn) f32 scratch, resident across K.
    k = pl.program_id(2)

    @pl.when(k == 0)
    def _():
        # Seed the accumulator with the bias: removes the zeros-store pass and
        # the final (tm, tn) VPU add.
        acc_ref[...] = jnp.broadcast_to(b_ref[...], acc_ref.shape)

    # Contract K of x (axis 1) against K of weight (axis 1): x @ W^T on the
    # MXU without materializing W^T (native transposed-RHS matmul).
    acc_ref[...] += lax.dot_general(
        x_ref[...], w_ref[...],
        dimension_numbers=(((1,), (1,)), ((), ())),
        preferred_element_type=jnp.float32,
    )

    @pl.when(k == pl.num_programs(2) - 1)
    def _():
        o_ref[...] = acc_ref[...].astype(o_ref.dtype)


def _affine_kernel_single(x_ref, w_ref, b_ref, o_ref):
    """Specialized case: the whole K dim fits in one tile -> no scratch."""
    acc = lax.dot_general(
        x_ref[...], w_ref[...],
        dimension_numbers=(((1,), (1,)), ((), ())),
        preferred_element_type=jnp.float32,
    )
    o_ref[...] = (acc + b_ref[...]).astype(o_ref.dtype)


# --------------------------------------------------------------------------
# Helpers
# --------------------------------------------------------------------------
def _round_up(x, m):
    return ((x + m - 1) // m) * m


def _cdiv(a, b):
    return (a + b - 1) // b


def _balanced_tile(dim, max_tile, align):
    """Largest aligned tile <= max_tile that keeps padding waste < one align unit
    per tile (e.g. m=300 -> tile 304 instead of padding to 512)."""
    dim_aligned = _round_up(dim, align)
    if dim_aligned <= max_tile:
        return dim_aligned
    n_tiles = _cdiv(dim, max_tile)
    return _round_up(_cdiv(dim, n_tiles), align)


@functools.lru_cache(maxsize=1)
def _vmem_limit_bytes():
    """Chip-gated VMEM budget: ~3/4 of physical capacity, capped.
    v5e/v6e (128 MiB) -> 96 MiB; v7x (64 MiB per TC) -> 48 MiB."""
    cap = 64 * 1024 * 1024
    try:
        cap = int(pltpu.get_tpu_info().vmem_capacity_bytes)
    except Exception:
        pass
    return min((cap * 3) // 4, 96 * 1024 * 1024)


# --------------------------------------------------------------------------
# Wrapper
# --------------------------------------------------------------------------
@functools.partial(jax.jit, static_argnames=("tm", "tn", "tk", "compute_dtype"))
def affine_transform(x, weight, bias, *, tm=512, tn=512, tk=1024,
                     compute_dtype=jnp.bfloat16):
    """y = x @ weight.T + bias via a Pallas TPU kernel.

    x:      (batch, seq, input_dim)
    weight: (output_dim, input_dim)   (PyTorch nn.Linear layout, used as-is)
    bias:   (output_dim,)
    compute_dtype: MXU operand dtype.  Default bf16 (f32 accumulation in the
        kernel).  Pass None to keep f32 operands for exact nn.Linear parity.
    """
    batch, seq, input_dim = x.shape
    output_dim, k_dim = weight.shape
    assert k_dim == input_dim
    out_dtype = x.dtype

    m = batch * seq
    x2d = x.reshape(m, input_dim)

    if compute_dtype is not None:
        x2d = x2d.astype(compute_dtype)
        weight = weight.astype(compute_dtype)
    op_itemsize = jnp.dtype(x2d.dtype).itemsize

    # Native sublane packing for the M axis (second-to-last dim of x / out
    # blocks): 8 rows for 32-bit operands, 16 for bf16.
    m_align = 16 if op_itemsize == 2 else 8

    # ---- balanced, aligned tile sizes ----
    tm_eff = _balanced_tile(m, tm, m_align)
    tn_eff = _balanced_tile(output_dim, tn, 128)
    tk_eff = _balanced_tile(input_dim, tk, 128)

    m_p = _round_up(m, tm_eff)
    n_p = _round_up(output_dim, tn_eff)
    k_p = _round_up(input_dim, tk_eff)

    m_tiles = m_p // tm_eff
    n_tiles = n_p // tn_eff
    k_tiles = k_p // tk_eff

    # v7x has 2 TensorCores: if the whole parallel (i, j) grid is one tile and
    # N has an even number of 128-lane blocks, split N so both cores get work
    # (cheap no-op cost on single-TC v5e/v6e).
    if m_tiles * n_tiles == 1 and n_p >= 256 and (n_p // 128) % 2 == 0:
        tn_eff = n_p // 2
        n_tiles = 2

    # ---- pad only when needed (static under jit) ----
    # Zero padding on K contributes nothing to the dot; padded N/M rows are
    # sliced off below.  For repeated calls, the weight/bias cast+pad can be
    # hoisted to model init.
    if m_p != m or k_p != input_dim:
        x_p = jnp.pad(x2d, ((0, m_p - m), (0, k_p - input_dim)))
    else:
        x_p = x2d
    if n_p != output_dim or k_p != input_dim:
        w_p = jnp.pad(weight, ((0, n_p - output_dim), (0, k_p - input_dim)))
    else:
        w_p = weight
    b32 = bias.astype(jnp.float32)
    if n_p != output_dim:
        b32 = jnp.pad(b32, (0, n_p - output_dim))
    b_p = b32.reshape(1, n_p)

    compiler_params = pltpu.CompilerParams(
        dimension_semantics=(("parallel", "parallel") if k_tiles == 1
                             else ("parallel", "parallel", "arbitrary")),
        vmem_limit_bytes=_vmem_limit_bytes(),
    )

    if k_tiles == 1:
        # Whole reduction in one tile: no accumulator scratch, direct store.
        out2d = pl.pallas_call(
            _affine_kernel_single,
            out_shape=jax.ShapeDtypeStruct((m_p, n_p), out_dtype),
            grid_spec=pltpu.PrefetchScalarGridSpec(
                num_scalar_prefetch=0,
                grid=(m_tiles, n_tiles),
                in_specs=[
                    pl.BlockSpec((tm_eff, tk_eff), lambda i, j: (i, 0)),  # x
                    pl.BlockSpec((tn_eff, tk_eff), lambda i, j: (j, 0)),  # W (N,K)
                    pl.BlockSpec((1, tn_eff), lambda i, j: (0, j)),       # bias
                ],
                out_specs=pl.BlockSpec((tm_eff, tn_eff), lambda i, j: (i, j)),
            ),
            compiler_params=compiler_params,
        )(x_p, w_p, b_p)
    else:
        # Weight BlockSpec; small-M shapes are weight-bandwidth bound -> deepen
        # the weight pipeline so large-tk DMAs stay hidden.
        w_spec = pl.BlockSpec((tn_eff, tk_eff), lambda i, j, k: (j, k))
        if m_p <= 256 and k_tiles >= 3:
            try:
                w_spec = pl.BlockSpec((tn_eff, tk_eff), lambda i, j, k: (j, k),
                                      pipeline_mode=pl.Buffered(3))
            except TypeError:
                pass  # older jax without pipeline_mode kwarg

        out2d = pl.pallas_call(
            _affine_kernel_kloop,
            out_shape=jax.ShapeDtypeStruct((m_p, n_p), out_dtype),
            grid_spec=pltpu.PrefetchScalarGridSpec(
                num_scalar_prefetch=0,
                grid=(m_tiles, n_tiles, k_tiles),
                in_specs=[
                    pl.BlockSpec((tm_eff, tk_eff), lambda i, j, k: (i, k)),  # x
                    w_spec,                                                  # W (N,K)
                    pl.BlockSpec((1, tn_eff), lambda i, j, k: (0, j)),       # bias
                ],
                out_specs=pl.BlockSpec((tm_eff, tn_eff), lambda i, j, k: (i, j)),
                scratch_shapes=[pltpu.VMEM((tm_eff, tn_eff), jnp.float32)],
            ),
            compiler_params=compiler_params,
        )(x_p, w_p, b_p)

    return out2d[:m, :output_dim].reshape(batch, seq, output_dim)


# --------------------------------------------------------------------------
# Self-test
# --------------------------------------------------------------------------
if __name__ == "__main__":
    # Small shapes consistent with the module: AffineTransform(32, 32) applied
    # to a (batch=2, seq=8, input_dim=32) FSMN feature tensor.
    batch, seq, input_dim, output_dim = 2, 8, 32, 32

    key = jax.random.PRNGKey(0)
    kx, kw, kb = jax.random.split(key, 3)

    # nn.Linear-style uniform(-1/sqrt(in), 1/sqrt(in)) init.
    bound = 1.0 / jnp.sqrt(jnp.float32(input_dim))
    weight = jax.random.uniform(kw, (output_dim, input_dim), jnp.float32,
                                minval=-bound, maxval=bound)
    bias = jax.random.uniform(kb, (output_dim,), jnp.float32,
                              minval=-bound, maxval=bound)
    x = jax.random.normal(kx, (batch, seq, input_dim), jnp.float32)

    # Pure-JAX reference (nn.Linear forward; quant stubs are identity in float).
    ref = x @ weight.T + bias

    # Primary path: bf16 MXU operands, f32 accumulation.
    y_bf16 = jax.block_until_ready(affine_transform(x, weight, bias))
    assert y_bf16.shape == (batch, seq, output_dim)
    assert jnp.allclose(y_bf16, ref, atol=5e-2, rtol=5e-2)

    # Exact-parity path: f32 operands match nn.Linear numerics tightly.
    y_f32 = jax.block_until_ready(
        affine_transform(x, weight, bias, compute_dtype=None))
    assert y_f32.shape == (batch, seq, output_dim)
    assert jnp.allclose(y_f32, ref, atol=1e-5, rtol=1e-5)

    print("KERNEL_OK")
</pallas_src>

<mosaic_0001>
module attributes {stable_mosaic.version = 11 : i64} {
  func.func @_affine_kernel_single(%arg0: i32, %arg1: i32, %arg2: memref<16x128xbf16, #tpu.memory_space<vmem>>, %arg3: memref<128x128xbf16, #tpu.memory_space<vmem>>, %arg4: memref<1x128xf32, #tpu.memory_space<vmem>>, %arg5: memref<16x128xf32, #tpu.memory_space<vmem>>) attributes {dimension_semantics = [#tpu.dimension_semantics<parallel>, #tpu.dimension_semantics<parallel>], iteration_bounds = array<i64: 1, 1>, scalar_prefetch = 0 : i64, scratch_operands = 0 : i64, tpu.core_type = #tpu.core_type<tc>, window_params = [{transform_indices = @transform_0, window_bounds = array<i64: 16, 128>}, {transform_indices = @transform_1, window_bounds = array<i64: 128, 128>}, {transform_indices = @transform_2, window_bounds = array<i64: 1, 128>}, {transform_indices = @transform_3, window_bounds = array<i64: 16, 128>}]} {
    %c0 = arith.constant 0 : index
    %c0_0 = arith.constant 0 : index
    %0 = vector.load %arg2[%c0, %c0_0] : memref<16x128xbf16, #tpu.memory_space<vmem>>, vector<16x128xbf16>
    %c0_1 = arith.constant 0 : index
    %c0_2 = arith.constant 0 : index
    %1 = vector.load %arg3[%c0_1, %c0_2] : memref<128x128xbf16, #tpu.memory_space<vmem>>, vector<128x128xbf16>
    %cst = arith.constant dense<0.000000e+00> : vector<16x128xf32>
    %2 = tpu.matmul %0, %1, %cst {dimension_numbers = #tpu.dot_dimension_numbers<[1], [1], [0], [0], [0, 0, 1, 0], [], []>} : vector<16x128xbf16>, vector<128x128xbf16>, vector<16x128xf32> -> vector<16x128xf32>
    %c0_3 = arith.constant 0 : index
    %c0_4 = arith.constant 0 : index
    %3 = vector.load %arg4[%c0_3, %c0_4] : memref<1x128xf32, #tpu.memory_space<vmem>>, vector<1x128xf32>
    %4 = vector.broadcast %3 : vector<1x128xf32> to vector<16x128xf32>
    %5 = arith.addf %2, %4 : vector<16x128xf32>
    %c0_5 = arith.constant 0 : index
    %c0_6 = arith.constant 0 : index
    %6 = vector.load %arg5[%c0_5, %c0_6] : memref<16x128xf32, #tpu.memory_space<vmem>>, vector<16x128xf32>
    tpu.vector_store %arg5[%c0_5, %c0_6], %5 {strides = array<i32>} : memref<16x128xf32, #tpu.memory_space<vmem>>, vector<16x128xf32>,
    return
  }
  func.func @transform_0(%arg0: i32, %arg1: i32) -> (i32, i32) {
    %c0_i32 = arith.constant 0 : i32
    %c0_i32_0 = arith.constant 0 : i32
    return %arg0, %c0_i32 : i32, i32
  }
  func.func @transform_1(%arg0: i32, %arg1: i32) -> (i32, i32) {
    %c0_i32 = arith.constant 0 : i32
    %c0_i32_0 = arith.constant 0 : i32
    return %arg1, %c0_i32 : i32, i32
  }
  func.func @transform_2(%arg0: i32, %arg1: i32) -> (i32, i32) {
    %c0_i32 = arith.constant 0 : i32
    %c0_i32_0 = arith.constant 0 : i32
    return %c0_i32, %arg1 : i32, i32
  }
  func.func @transform_3(%arg0: i32, %arg1: i32) -> (i32, i32) {
    %c0_i32 = arith.constant 0 : i32
    return %arg0, %arg1 : i32, i32
  }
}

</mosaic_0001>

<llo_original>
// kernel: affine_transform.1
$region0: #{affine_transform.1}
  #allocation0 [shape = 'u32[]', space=smem, size = 0x4, offset = 0x4, fixed_abs, tag = 'smem constant byte address 0x4 - core index']
  #allocation1 [shape = 'u32[144,128]{1,0:T(1,128)}', space=vmem, size = 0x12000, scoped, tag = 'internal scratch']
  %s0 = inlined_call_operand.vmem [shape: bf16[16,128], index: 0, kind: input, shape index: {}]
  %s1 = inlined_call_operand.vmem [shape: bf16[128,128], index: 1, kind: input, shape index: {}]
  %s2 = inlined_call_operand.vmem [shape: f32[1,128], index: 2, kind: input, shape index: {}]
  %s3 = inlined_call_operand.vmem [shape: f32[16,128], index: 3, kind: output, shape index: {}]
  %s4 = sld [smem:[#allocation0]]
  $region22: #{affine_transform.1} parent=0
    _
  %s6 = ssub.s32 1, %s4
  %s7 = scalar_select 0, %s6, %s4
  // Predicated region
  $region2: #{affine_transform.1} parent=0 // pred_check
    _
  $region3: #{affine_transform.1} parent=0 // pred_check_branch
    %9 = sbr.rel (0) target = $region5
  $region4: #{affine_transform.1} parent=0 // pred_region
    _
  $region5: #{affine_transform.1} parent=0 // pred_fallthru
    _
  // Predicated region
  $region6: #{affine_transform.1} parent=0 // pred_check
    _
  $region7: #{affine_transform.1} parent=0 // pred_check_branch
    %11 = sbr.rel (0) target = $region9
  $region8: #{affine_transform.1} parent=0 // pred_region
    _
  $region9: #{affine_transform.1} parent=0 // pred_fallthru
    _
  // Predicated region
  $region10: #{affine_transform.1} parent=0 // pred_check
    _
  $region11: #{affine_transform.1} parent=0 // pred_check_branch
    %13 = sbr.rel (0) target = $region13
  $region12: #{affine_transform.1} parent=0 // pred_region
    _
  $region13: #{affine_transform.1} parent=0 // pred_fallthru
    _
  %v15 = vld [vmem:[%s0] sm:$0xf]
  %v16 = vld [vmem:[%s0 + $0x4] sm:$0xf]
  %v17 = vld [vmem:[%s1] sm:$0xf]
  %v18 = vld [vmem:[%s1 + $0x4] sm:$0xf]
  %v19 = vld [vmem:[%s1 + $0x8] sm:$0xf]
  %v20 = vld [vmem:[%s1 + $0xc] sm:$0xf]
  %v21 = vld [vmem:[%s1 + $0x10] sm:$0xf]
  %v22 = vld [vmem:[%s1 + $0x14] sm:$0xf]
  %v23 = vld [vmem:[%s1 + $0x18] sm:$0xf]
  %v24 = vld [vmem:[%s1 + $0x1c] sm:$0xf]
  %v25 = vld [vmem:[%s1 + $0x20] sm:$0xf]
  %v26 = vld [vmem:[%s1 + $0x24] sm:$0xf]
  %v27 = vld [vmem:[%s1 + $0x28] sm:$0xf]
  %v28 = vld [vmem:[%s1 + $0x2c] sm:$0xf]
  %v29 = vld [vmem:[%s1 + $0x30] sm:$0xf]
  %v30 = vld [vmem:[%s1 + $0x34] sm:$0xf]
  %v31 = vld [vmem:[%s1 + $0x38] sm:$0xf]
  %v32 = vld [vmem:[%s1 + $0x3c] sm:$0xf]
  %v33 = vld [vmem:[%s2] sm:$0x1]
  %v35 = vlaneseq
  %v36 = vshrl.u32 %v35, 7
  %v37 = vsub.s32 0, %v36
  %v38 = vrot.slane %v33, %v37
  %v42 = vunpack.c.l.b16 %v15
  %v43 = vunpack.c.l.b16 %v16
  %v44 = vpack.c.b16 %v43, %v42
  %v62 = vunpack.c.l.b16 %v17
  %v63 = vunpack.c.l.b16 %v18
  %v64 = vunpack.c.l.b16 %v19
  %v65 = vunpack.c.l.b16 %v20
  %v66 = vunpack.c.l.b16 %v21
  %v67 = vunpack.c.l.b16 %v22
  %v68 = vunpack.c.l.b16 %v23
  %v69 = vunpack.c.l.b16 %v24
  %v70 = vunpack.c.l.b16 %v25
  %v71 = vunpack.c.l.b16 %v26
  %v72 = vunpack.c.l.b16 %v27
  %v73 = vunpack.c.l.b16 %v28
  %v74 = vunpack.c.l.b16 %v29
  %v75 = vunpack.c.l.b16 %v30
  %v76 = vunpack.c.l.b16 %v31
  %v77 = vunpack.c.l.b16 %v32
  %v78 = vpack.c.b16 %v63, %v62
  %v79 = vpack.c.b16 %v65, %v64
  %v80 = vpack.c.b16 %v67, %v66
  %v81 = vpack.c.b16 %v69, %v68
  %v82 = vpack.c.b16 %v71, %v70
  %v83 = vpack.c.b16 %v73, %v72
  %v84 = vpack.c.b16 %v75, %v74
  %v85 = vpack.c.b16 %v77, %v76
  %94 = vmatprep.subr.bf16.mxu0 0
  %95 = vmatpush1.bf16.xpose.msra.mxu0 %v78
  %96 = vmatprep.subr.bf16.mxu0 0
  %97 = vmatpush1.bf16.xpose.msra.mxu0 %v79
  %98 = vmatprep.subr.bf16.mxu0 0
  %99 = vmatpush1.bf16.xpose.msra.mxu0 %v80
  %100 = vmatprep.subr.bf16.mxu0 0
  %101 = vmatpush1.bf16.xpose.msra.mxu0 %v81
  %102 = vmatprep.subr.bf16.mxu0 0
  %103 = vmatpush1.bf16.xpose.msra.mxu0 %v82
  %104 = vmatprep.subr.bf16.mxu0 0
  %105 = vmatpush1.bf16.xpose.msra.mxu0 %v83
  %106 = vmatprep.subr.bf16.mxu0 0
  %107 = vmatpush1.bf16.xpose.msra.mxu0 %v84
  %108 = vmatprep.subr.bf16.mxu0 0
  %109 = vmatpush1.bf16.xpose.msra.mxu0 %v85
  %110 = vmatprep.subr.bf16.mxu0 0
  %111 = vmatpush1.bf16.xpose.msra.mxu0 0
  %112 = vmatprep.subr.bf16.mxu0 0
  %113 = vmatpush1.bf16.xpose.msra.mxu0 0
  %114 = vmatprep.subr.bf16.mxu0 0
  %115 = vmatpush1.bf16.xpose.msra.mxu0 0
  %116 = vmatprep.subr.bf16.mxu0 0
  %117 = vmatpush1.bf16.xpose.msra.mxu0 0
  %118 = vmatprep.subr.bf16.mxu0 0
  %119 = vmatpush1.bf16.xpose.msra.mxu0 0
  %120 = vmatprep.subr.bf16.mxu0 0
  %121 = vmatpush1.bf16.xpose.msra.mxu0 0
  %122 = vmatprep.subr.bf16.mxu0 0
  %123 = vmatpush1.bf16.xpose.msra.mxu0 0
  %124 = vmatprep.subr.bf16.mxu0 0
  %125 = vmatpush1.bf16.xpose.msra.mxu0 0
  %126 = vmatprep.mubr.bf16.mxu0 0
  %127 = vmatmul.mubr.bf16.gmra.mrb[0].mxu0 %v44
  %v128 = vpop.f32.mrb[0].mxu0
  %v129 = vadd.f32 %v38, %v128
  %v130 = vpop.f32.mrb[0].mxu0
  %v131 = vpop.f32.mrb[0].mxu0
  %v132 = vadd.f32 %v38, %v131
  %v133 = vpop.f32.mrb[0].mxu0
  %134 = vdwg.mxu0
  %135 = vst [vmem:[%s3] sm:$0xff] %v129
  %136 = vst [vmem:[%s3 + $0x8] sm:$0xff] %v132
  // Predicated region
  $region14: #{affine_transform.1} parent=0 // pred_check
    _
  $region15: #{affine_transform.1} parent=0 // pred_check_branch
    %138 = sbr.rel (0) target = $region17
  $region16: #{affine_transform.1} parent=0 // pred_region
    _
  $region17: #{affine_transform.1} parent=0 // pred_fallthru
    _
  // Predicated region
  $region18: #{affine_transform.1} parent=0 // pred_check
    _
  $region19: #{affine_transform.1} parent=0 // pred_check_branch
    %140 = sbr.rel (0) target = $region21
  $region20: #{affine_transform.1} parent=0 // pred_region
    _
  $region21: #{affine_transform.1} parent=0 // pred_fallthru
    _

</llo_original>
